<compile_context>
chip_gen: v5e
topology: v5e:2x2
jax: 0.10.0
libtpu: 0.0.40
codegen_flags: <defaults>
</compile_context>

<pallas_src>
import functools
import math

import jax
import jax.numpy as jnp
from jax import lax
from jax.experimental import pallas as pl
from jax.experimental.pallas import tpu as pltpu

GAMMA = 2.0
ALPHA = 0.25
_LANES = 128
_MAX_TILE_ROWS = 4096   # 4096x128xf32 = 2 MiB/block; 2 inputs x 2 buffers = 8 MiB
_CHUNK_ROWS = 128       # rows folded into the (8,128) accumulator per loop step


def _focal_loss_kernel(x_ref, t_ref, o_ref, *, tile_rows, chunk_rows,
                       rows_in_last_tile, needs_mask, gamma, alpha):
    num_chunks = tile_rows // chunk_rows

    def tile_partial(masked):
        def body(c, acc):
            r0 = pl.multiple_of(c * chunk_rows, chunk_rows)
            x = x_ref[pl.ds(r0, chunk_rows), :].astype(jnp.float32)
            t = t_ref[pl.ds(r0, chunk_rows), :].astype(jnp.float32)
            # Numerically-stable BCE with logits
            # (== F.binary_cross_entropy_with_logits, reduction='none'):
            #   bce = max(x, 0) - x*t + log1p(exp(-|x|))
            bce = jnp.maximum(x, 0.0) - x * t + jnp.log1p(jnp.exp(-jnp.abs(x)))
            pt = jnp.exp(-bce)
            om = 1.0 - pt
            if gamma == 2.0:
                # Explicit square stays on the 4-wide VALU; the single EUP slot
                # already carries exp/log1p/exp.
                mod = om * om
            else:
                mod = om ** gamma
            f = alpha * mod * bce
            if masked:
                # Only the last (ragged) grid tile takes this path: rows past
                # the array end hold garbage from the partial DMA -> zero them.
                row = lax.broadcasted_iota(jnp.int32, (chunk_rows, _LANES), 0)
                f = jnp.where(r0 + row < rows_in_last_tile, f, 0.0)
            # Sublane-aligned fold: (chunk_rows,128) -> (8,128) partial sum,
            # pure VPU adds (no cross-lane work in the kernel).
            return acc + jnp.sum(f.reshape(chunk_rows // 8, 8, _LANES), axis=0)

        return lax.fori_loop(0, num_chunks, body,
                             jnp.zeros((8, _LANES), jnp.float32))

    if needs_mask:
        i = pl.program_id(0)
        last = pl.num_programs(0) - 1

        @pl.when(i == last)
        def _():
            o_ref[...] = tile_partial(masked=True)

        @pl.when(i != last)
        def _():
            o_ref[...] = tile_partial(masked=False)
    else:
        o_ref[...] = tile_partial(masked=False)


def _focal_elementwise(x, t, gamma, alpha):
    x = x.astype(jnp.float32)
    t = t.astype(jnp.float32)
    bce = jnp.maximum(x, 0.0) - x * t + jnp.log1p(jnp.exp(-jnp.abs(x)))
    pt = jnp.exp(-bce)
    return alpha * (1.0 - pt) ** gamma * bce


def focal_loss(inputs, targets, gamma=GAMMA, alpha=ALPHA, reduction="mean",
               max_tile_rows=_MAX_TILE_ROWS):
    assert inputs.shape == targets.shape
    assert max_tile_rows % 8 == 0
    if reduction not in ("mean", "sum"):
        # TODO(synk): reduction='none' (full elementwise output) not implemented
        # in this kernel.
        raise NotImplementedError("reduction must be 'mean' or 'sum'")

    gamma = float(gamma)
    alpha = float(alpha)
    n = int(inputs.size)

    x_flat = inputs.reshape(-1)
    t_flat = targets.reshape(-1)

    n_main = (n // _LANES) * _LANES   # lane-aligned bulk handled by the kernel
    tail = n - n_main                 # < 128 leftover elements -> plain JAX

    total = jnp.zeros((), jnp.float32)

    if n_main:
        rows = n_main // _LANES
        # Contiguous row-major reshape is free; slice only when a tail exists,
        # so the common lane-aligned case never copies the operands in HBM.
        x2d = (x_flat if tail == 0 else x_flat[:n_main]).reshape(rows, _LANES)
        t2d = (t_flat if tail == 0 else t_flat[:n_main]).reshape(rows, _LANES)

        if rows >= max_tile_rows:
            tile_rows = max_tile_rows
        else:
            tile_rows = ((rows + 7) // 8) * 8          # single tile, sublane-aligned
        chunk_rows = math.gcd(tile_rows, _CHUNK_ROWS)  # divides tile_rows, multiple of 8
        num_tiles = pl.cdiv(rows, tile_rows)
        needs_mask = (rows % tile_rows) != 0           # only the last tile can be ragged
        rows_in_last_tile = rows - (num_tiles - 1) * tile_rows

        kernel = functools.partial(
            _focal_loss_kernel,
            tile_rows=tile_rows,
            chunk_rows=chunk_rows,
            rows_in_last_tile=rows_in_last_tile,
            needs_mask=needs_mask,
            gamma=gamma,
            alpha=alpha,
        )

        partials = pl.pallas_call(
            kernel,
            out_shape=jax.ShapeDtypeStruct((num_tiles * 8, _LANES), jnp.float32),
            grid_spec=pltpu.PrefetchScalarGridSpec(
                num_scalar_prefetch=0,
                grid=(num_tiles,),
                in_specs=[
                    pl.BlockSpec((tile_rows, _LANES), lambda i: (i, 0)),
                    pl.BlockSpec((tile_rows, _LANES), lambda i: (i, 0)),
                ],
                out_specs=pl.BlockSpec((8, _LANES), lambda i: (i, 0)),
            ),
            compiler_params=pltpu.CompilerParams(
                # Independent tiles -> shard across v7x's two TensorCores.
                dimension_semantics=("parallel",),
            ),
        )(x2d, t2d)

        total = total + jnp.sum(partials, dtype=jnp.float32)

    if tail:
        total = total + jnp.sum(
            _focal_elementwise(x_flat[n_main:], t_flat[n_main:], gamma, alpha),
            dtype=jnp.float32)

    if reduction == "mean":
        return total / jnp.float32(n)
    return total


def focal_loss_ref(inputs, targets, gamma=GAMMA, alpha=ALPHA):
    return jnp.mean(_focal_elementwise(inputs, targets, gamma, alpha))


if __name__ == "__main__":
    key = jax.random.PRNGKey(0)
    k1, k2 = jax.random.split(key)

    # NCHW logits and {0,1} targets at small shapes (batch=2, channels=4, 16x16).
    x = jax.random.normal(k1, (2, 4, 16, 16), dtype=jnp.float32)
    tgt = (jax.random.uniform(k2, (2, 4, 16, 16)) > 0.5).astype(jnp.float32)
    loss = jax.block_until_ready(focal_loss(x, tgt))
    ref = focal_loss_ref(x, tgt)
    assert jnp.allclose(loss, ref, rtol=1e-5, atol=1e-6), (loss, ref)

    # Ragged total size (not a multiple of 128): exercises the JAX tail path.
    x2 = jax.random.normal(k1, (3, 5, 7, 11), dtype=jnp.float32)
    t2 = (jax.random.uniform(k2, (3, 5, 7, 11)) > 0.5).astype(jnp.float32)
    loss2 = jax.block_until_ready(focal_loss(x2, t2))
    ref2 = focal_loss_ref(x2, t2)
    assert jnp.allclose(loss2, ref2, rtol=1e-5, atol=1e-6), (loss2, ref2)

    # Multi-tile grid with a ragged last tile (row mask via pl.when) + 'sum'
    # reduction, forced at a tiny tile size so the test stays cheap.
    x3 = jax.random.normal(k1, (1, 3, 23, 64), dtype=jnp.float32)   # 4416 elems
    t3 = (jax.random.uniform(k2, (1, 3, 23, 64)) > 0.5).astype(jnp.float32)
    loss3 = jax.block_until_ready(
        focal_loss(x3, t3, reduction="sum", max_tile_rows=8))
    ref3 = jnp.sum(_focal_elementwise(x3, t3, GAMMA, ALPHA))
    assert jnp.allclose(loss3, ref3, rtol=1e-4, atol=1e-4), (loss3, ref3)

    print("KERNEL_OK")
</pallas_src>

<mosaic_0001>
module attributes {stable_mosaic.version = 11 : i64} {
  func.func @_focal_loss_kernel(%arg0: i32, %arg1: memref<16x128xf32, #tpu.memory_space<vmem>>, %arg2: memref<16x128xf32, #tpu.memory_space<vmem>>, %arg3: memref<8x128xf32, #tpu.memory_space<vmem>>) attributes {dimension_semantics = [#tpu.dimension_semantics<parallel>], iteration_bounds = array<i64: 1>, scalar_prefetch = 0 : i64, scratch_operands = 0 : i64, tpu.core_type = #tpu.core_type<tc>, window_params = [{transform_indices = @transform_0, window_bounds = array<i64: 16, 128>}, {transform_indices = @transform_1, window_bounds = array<i64: 16, 128>}, {transform_indices = @transform_2, window_bounds = array<i64: 8, 128>}]} {
    %cst = arith.constant 0.000000e+00 : f32
    %0 = vector.broadcast %cst : f32 to vector<8x128xf32>
    %c0_i32 = arith.constant 0 : i32
    %c16_i32 = arith.constant 16 : i32
    %1 = arith.muli %c0_i32, %c16_i32 : i32
    %2 = tpu.assume_multiple %1, 16 : i32
    %3 = arith.index_cast %2 : i32 to index
    %c0 = arith.constant 0 : index
    %4 = vector.load %arg1[%3, %c0] : memref<16x128xf32, #tpu.memory_space<vmem>>, vector<16x128xf32>
    %5 = arith.index_cast %2 : i32 to index
    %c0_0 = arith.constant 0 : index
    %6 = vector.load %arg2[%5, %c0_0] : memref<16x128xf32, #tpu.memory_space<vmem>>, vector<16x128xf32>
    %cst_1 = arith.constant 0.000000e+00 : f32
    %7 = vector.broadcast %cst_1 : f32 to vector<16x128xf32>
    %8 = arith.maximumf %4, %7 : vector<16x128xf32>
    %9 = arith.mulf %4, %6 : vector<16x128xf32>
    %10 = arith.subf %8, %9 : vector<16x128xf32>
    %11 = math.absf %4 : vector<16x128xf32>
    %cst_2 = arith.constant 0.000000e+00 : f32
    %12 = vector.broadcast %cst_2 : f32 to vector<16x128xf32>
    %13 = arith.subf %12, %11 : vector<16x128xf32>
    %14 = math.exp %13 : vector<16x128xf32>
    %15 = math.log1p %14 : vector<16x128xf32>
    %16 = arith.addf %10, %15 : vector<16x128xf32>
    %cst_3 = arith.constant 0.000000e+00 : f32
    %17 = vector.broadcast %cst_3 : f32 to vector<16x128xf32>
    %18 = arith.subf %17, %16 : vector<16x128xf32>
    %19 = math.exp %18 : vector<16x128xf32>
    %cst_4 = arith.constant 1.000000e+00 : f32
    %20 = vector.broadcast %cst_4 : f32 to vector<16x128xf32>
    %21 = arith.subf %20, %19 : vector<16x128xf32>
    %22 = arith.mulf %21, %21 : vector<16x128xf32>
    %cst_5 = arith.constant 2.500000e-01 : f32
    %23 = vector.broadcast %cst_5 : f32 to vector<16x128xf32>
    %24 = arith.mulf %23, %22 : vector<16x128xf32>
    %25 = arith.mulf %24, %16 : vector<16x128xf32>
    %26 = vector.shape_cast %25 : vector<16x128xf32> to vector<2x8x128xf32>
    %cst_6 = arith.constant dense<0.000000e+00> : vector<8x128xf32>
    %27 = vector.multi_reduction <add>, %26, %cst_6 [0] : vector<2x8x128xf32> to vector<8x128xf32>
    %28 = arith.addf %0, %27 : vector<8x128xf32>
    %c1_i32 = arith.constant 1 : i32
    %c0_7 = arith.constant 0 : index
    %c0_8 = arith.constant 0 : index
    %29 = vector.load %arg3[%c0_7, %c0_8] : memref<8x128xf32, #tpu.memory_space<vmem>>, vector<8x128xf32>
    tpu.vector_store %arg3[%c0_7, %c0_8], %28 {strides = array<i32>} : memref<8x128xf32, #tpu.memory_space<vmem>>, vector<8x128xf32>,
    return
  }
  func.func @transform_0(%arg0: i32) -> (i32, i32) {
    %c0_i32 = arith.constant 0 : i32
    %c0_i32_0 = arith.constant 0 : i32
    return %arg0, %c0_i32 : i32, i32
  }
  func.func @transform_1(%arg0: i32) -> (i32, i32) {
    %c0_i32 = arith.constant 0 : i32
    %c0_i32_0 = arith.constant 0 : i32
    return %arg0, %c0_i32 : i32, i32
  }
  func.func @transform_2(%arg0: i32) -> (i32, i32) {
    %c0_i32 = arith.constant 0 : i32
    %c0_i32_0 = arith.constant 0 : i32
    return %arg0, %c0_i32 : i32, i32
  }
}

</mosaic_0001>

<llo_original>
// kernel: tpu_custom_call.1
$region0: #{tpu_custom_call.1}
  #allocation0 [shape = 'u32[]', space=smem, size = 0x4, offset = 0x4, fixed_abs, tag = 'smem constant byte address 0x4 - core index']
  #allocation1 [shape = 'u32[72,128]{1,0:T(1,128)}', space=vmem, size = 0x9000, scoped, tag = 'internal scratch']
  %s0 = inlined_call_operand.hbm [shape: f32[16,128], index: 0, kind: input, shape index: {}]
  %s1 = inlined_call_operand.hbm [shape: f32[16,128], index: 1, kind: input, shape index: {}]
  %s2 = inlined_call_operand.hbm [shape: f32[8,128], index: 2, kind: output, shape index: {}]
  %s3 = sld [smem:[#allocation0]]
  $region26: #{tpu_custom_call.1} parent=0
    _
  %s5 = ssub.s32 1, %s3
  %s6 = scalar_select 0, %s5, %s3
  $region1: #{tpu_custom_call.1} parent=0
    #allocation2 [shape = 'u8[8192]{0}', space=vmem, size = 0x2000, scoped, tag = 'input window, operand 0, single buffered']
    #allocation3 [shape = 's32[1]{0}', space=sflag, size = 0x4, scoped, tag = 'scoped memory for tpu_custom_call.1']
    #allocation4 [shape = 's32[1]{0}', space=sflag, size = 0x4, scoped, tag = 'scoped memory for tpu_custom_call.1']
    #allocation5 [shape = 'u8[8192]{0}', space=vmem, size = 0x2000, scoped, tag = 'input window, operand 1, single buffered']
    #allocation6 [shape = 's32[1]{0}', space=sflag, size = 0x4, scoped, tag = 'scoped memory for tpu_custom_call.1']
    #allocation7 [shape = 'u8[4096]{0}', space=vmem, size = 0x1000, scoped, tag = 'output window, operand 0, single buffered']
    %7 = vsyncpa [#allocation3], 0
    %8 = vsyncpa [#allocation6], 0
    %9 = vsyncpa [#allocation4], 0
    // Predicated region
    $region2: #{tpu_custom_call.1} parent=1 // pred_check
      _
    $region3: #{tpu_custom_call.1} parent=1 // pred_check_branch
      %11 = sbr.rel (0) target = $region5
    $region4: #{tpu_custom_call.1} parent=1 // pred_region
      %13 = vsyncadd [#allocation3], 0
      %s14 = sshll.u32 %s0, 4
      %s15 = int_to_ptr.hbm [resolvable:$true] %s14
      %s16 = sshll.u32 [#allocation2], 4
      %s17 = int_to_ptr.vmem [resolvable:$true] %s16
      %22 = dma.hbm_to_vmem [thread:$0]  %s15, 256, %s17, [#allocation3], 128, 128, 8
    $region5: #{tpu_custom_call.1} parent=1 // pred_fallthru
      _
    // Predicated region
    $region6: #{tpu_custom_call.1} parent=1 // pred_check
      _
    $region7: #{tpu_custom_call.1} parent=1 // pred_check_branch
      %24 = sbr.rel (0) target = $region9
    $region8: #{tpu_custom_call.1} parent=1 // pred_region
      %26 = vsyncadd [#allocation6], 0
      %s27 = sshll.u32 %s1, 4
      %s28 = int_to_ptr.hbm [resolvable:$true] %s27
      %s29 = sshll.u32 [#allocation5], 4
      %s30 = int_to_ptr.vmem [resolvable:$true] %s29
      %35 = dma.hbm_to_vmem [thread:$0]  %s28, 256, %s30, [#allocation6], 128, 128, 8
    $region9: #{tpu_custom_call.1} parent=1 // pred_fallthru
      _
    // Predicated region
    $region10: #{tpu_custom_call.1} parent=1 // pred_check
      _
    $region11: #{tpu_custom_call.1} parent=1 // pred_check_branch
      %37 = sbr.rel (0) target = $region13
    $region12: #{tpu_custom_call.1} parent=1 // pred_region
      %39 = dma.done [#allocation3], 256
    $region13: #{tpu_custom_call.1} parent=1 // pred_fallthru
      _
    // Predicated region
    $region14: #{tpu_custom_call.1} parent=1 // pred_check
      _
    $region15: #{tpu_custom_call.1} parent=1 // pred_check_branch
      %41 = sbr.rel (0) target = $region17
    $region16: #{tpu_custom_call.1} parent=1 // pred_region
      %43 = dma.done [#allocation6], 256
    $region17: #{tpu_custom_call.1} parent=1 // pred_fallthru
      _
    %v44 = vld [vmem:[#allocation2] sm:$0xff]
    %v45 = vld [vmem:[#allocation2 + $0x8] sm:$0xff]
    %v46 = vld [vmem:[#allocation5] sm:$0xff]
    %v47 = vld [vmem:[#allocation5 + $0x8] sm:$0xff]
    %v48 = vmax.f32 %v44, 0.0
    %v49 = vmax.f32 %v45, 0.0
    %v50 = vmul.f32 %v44, %v46
    %v51 = vmul.f32 %v45, %v47
    %v52 = vsub.f32 %v48, %v50
    %v53 = vsub.f32 %v49, %v51
    %v54 = vand.u32 2147483647, %v44
    %v55 = vand.u32 2147483647, %v45
    %v56 = vsub.f32 0.0, %v54
    %v57 = vsub.f32 0.0, %v55
    %v58 = vmul.f32 %v56, 1.442695
    %v59 = vpow.pop %v58
    %v60 = vmul.f32 %v57, 1.442695
    %v61 = vpow.pop %v60
    %v62 = vadd.f32 %v59, 1.0
    %v63 = vlog2.pop %v62
    %v64 = vmul.f32 %v63, 0.6931472
    %v65 = vmul.f32 -0.5, %v59
    %v66 = vadd.f32 %v65, 1.0
    %v67 = vmul.f32 %v66, %v59
    %v68 = vand.u32 2147483647, %v59
    %vm69 = vcmp.lt.f32.partialorder %v68, 0.0004427343
    %v70 = vsel %vm69, %v67, %v64
    %v71 = vadd.f32 %v61, 1.0
    %v72 = vlog2.pop %v71
    %v73 = vmul.f32 %v72, 0.6931472
    %v74 = vmul.f32 -0.5, %v61
    %v75 = vadd.f32 %v74, 1.0
    %v76 = vmul.f32 %v75, %v61
    %v77 = vand.u32 2147483647, %v61
    %vm78 = vcmp.lt.f32.partialorder %v77, 0.0004427343
    %v79 = vsel %vm78, %v76, %v73
    %v80 = vadd.f32 %v52, %v70
    %v81 = vadd.f32 %v53, %v79
    %v82 = vsub.f32 0.0, %v80
    %v83 = vsub.f32 0.0, %v81
    %v84 = vmul.f32 %v82, 1.442695
    %v85 = vpow.pop %v84
    %v86 = vmul.f32 %v83, 1.442695
    %v87 = vpow.pop %v86
    %v88 = vsub.f32 1.0, %v85
    %v89 = vsub.f32 1.0, %v87
    %v90 = vmul.f32 %v88, %v88
    %v91 = vmul.f32 %v89, %v89
    %v92 = vmul.f32 %v90, 0.25
    %v93 = vmul.f32 %v91, 0.25
    %v94 = vmul.f32 %v92, %v80
    %v95 = vmul.f32 %v93, %v81
    %v96 = vadd.f32 %v94, %v95
    %v97 = vadd.f32 %v96, 0.0
    %98 = vst [vmem:[#allocation7] sm:$0xff] %v97
    // Predicated region
    $region18: #{tpu_custom_call.1} parent=1 // pred_check
      _
    $region19: #{tpu_custom_call.1} parent=1 // pred_check_branch
      %100 = sbr.rel (0) target = $region21
    $region20: #{tpu_custom_call.1} parent=1 // pred_region
      %102 = vsyncadd [#allocation4], 0
      %s104 = sshll.u32 [#allocation7], 4
      %s105 = int_to_ptr.vmem [resolvable:$true] %s104
      %s106 = sshll.u32 %s2, 4
      %s107 = int_to_ptr.hbm [resolvable:$true] %s106
      %109 = dma.vmem_to_hbm [thread:$0]  %s105, 128, %s107, [#allocation4]
    $region21: #{tpu_custom_call.1} parent=1 // pred_fallthru
      _
    // Predicated region
    $region22: #{tpu_custom_call.1} parent=1 // pred_check
      _
    $region23: #{tpu_custom_call.1} parent=1 // pred_check_branch
      %111 = sbr.rel (0) target = $region25
    $region24: #{tpu_custom_call.1} parent=1 // pred_region
      %113 = dma.done [#allocation4], 128
    $region25: #{tpu_custom_call.1} parent=1 // pred_fallthru
      _
    %114 = vsyncpa [#allocation3], 1
    %115 = vsyncpa [#allocation6], 1
    %116 = vsyncpa [#allocation4], 1

</llo_original>
